<compile_context>
chip_gen: v5e
topology: v5e:2x2
jax: 0.10.0
libtpu: 0.0.40
codegen_flags: <defaults>
</compile_context>

<pallas_src>
import jax
import jax.numpy as jnp
from jax.experimental import pallas as pl
from jax.experimental.pallas import tpu as pltpu

PAD_IN = 8          # padded input-feature width (sublane-aligned contraction)
PAD_OUT = 8         # padded output width (full-array last dim -> legal block)
NEG_INF = -1.0e30   # "minus infinity" bias for padded logits


def _round_up(n, m):
    return (n + m - 1) // m * m


def _default_num_steps():
    # v7x has 2 TensorCores per chip and "parallel" grid axes are sharded
    # across them: give each core exactly one batch tile.  v5e/v6e: 1 step.
    try:
        kind = jax.devices()[0].device_kind.lower()
    except Exception:
        return 1
    return 2 if ("v7" in kind or "7x" in kind) else 1


def mlp_kernel(x_ref,
               w0_ref, b0_ref,
               w1_ref, b1_ref,
               w2_ref, b2_ref,
               w3_ref, b3_ref,
               o_ref):
    tb = o_ref.shape[0]
    row0 = pl.multiple_of(pl.program_id(0) * tb, 8)
    x = x_ref[pl.ds(row0, tb), :]                      # (TB, 8) f32, x is VMEM-resident

    # Layer 0 (padded K=8) -> ReLU.  All matmuls: f32 operands, f32 accumulate.
    h = jnp.dot(x, w0_ref[...], preferred_element_type=jnp.float32) + b0_ref[...]
    h = jnp.maximum(h, 0.0)                            # (TB, 128)

    # Layer 1 -> ReLU.
    h = jnp.dot(h, w1_ref[...], preferred_element_type=jnp.float32) + b1_ref[...]
    h = jnp.maximum(h, 0.0)                            # (TB, 64)

    # Layer 2 -> ReLU.
    h = jnp.dot(h, w2_ref[...], preferred_element_type=jnp.float32) + b2_ref[...]
    h = jnp.maximum(h, 0.0)                            # (TB, 32)

    # Output layer, padded to PAD_OUT lanes.  Padded lanes have zero weight
    # columns and a -1e30 bias, so they contribute nothing to max/sum below.
    z = jnp.dot(h, w3_ref[...], preferred_element_type=jnp.float32) + b3_ref[...]

    # Numerically stable log_softmax along the class axis.
    m = jnp.max(z, axis=1, keepdims=True)
    s = jnp.sum(jnp.exp(z - m), axis=1, keepdims=True)
    o_ref[...] = z - m - jnp.log(s)


def prepare_params(params):
    """One-time (hoisted) weight prep: pad layer 0's K and the output layer's N.

    params: list of (W_T, b); W_T shape = (in, out), b shape = (1, out), f32.
    """
    (w0, b0), (w1, b1), (w2, b2), (w3, b3) = params
    f_in, f_out = w0.shape[0], w3.shape[1]
    # Pad layer-0 contraction dim to PAD_IN with zero rows.
    w0p = jnp.zeros((PAD_IN, w0.shape[1]), jnp.float32).at[:f_in, :].set(w0)
    # Pad the output layer to PAD_OUT lanes (zero weights, -inf bias).
    w3p = jnp.zeros((w3.shape[0], PAD_OUT), jnp.float32).at[:, :f_out].set(w3)
    b3p = jnp.full((1, PAD_OUT), NEG_INF, jnp.float32).at[:, :f_out].set(b3)
    return ((w0p, b0), (w1, b1), (w2, b2), (w3p, b3p), f_in, f_out)


def mlp_forward(x, prepared, num_steps=None):
    """x: (B, f_in) f32.  prepared: output of prepare_params()."""
    (w0, b0), (w1, b1), (w2, b2), (w3, b3), f_in, f_out = prepared
    B = x.shape[0]
    if num_steps is None:
        num_steps = _default_num_steps()

    # 1 (or 2 on v7x) batch tiles: per-step overhead (~0.35 us) dominates at
    # this size, so collapse the grid.  Pad rows to a multiple of the tile and
    # features up to PAD_IN.
    tb = _round_up(pl.cdiv(B, num_steps), 8)
    bp = tb * num_steps
    xp = jnp.pad(x, ((0, bp - B), (0, PAD_IN - f_in)))
    grid = (num_steps,)

    row_map = lambda i: (i, 0)     # output: one row tile per grid step
    resident = lambda i: (0, 0)    # x / weights / biases: VMEM-resident

    in_specs = [
        pl.BlockSpec(xp.shape, resident),   # whole x resident: 1 contiguous DMA
        pl.BlockSpec(w0.shape, resident),
        pl.BlockSpec(b0.shape, resident),
        pl.BlockSpec(w1.shape, resident),
        pl.BlockSpec(b1.shape, resident),
        pl.BlockSpec(w2.shape, resident),
        pl.BlockSpec(b2.shape, resident),
        pl.BlockSpec(w3.shape, resident),
        pl.BlockSpec(b3.shape, resident),
    ]

    # Advisory cost estimate (kernel is tiny; keep XLA's scheduler honest).
    flops_per_row = 2 * (PAD_IN * 128 + 128 * 64 + 64 * 32 + 32 * PAD_OUT)
    weight_bytes = sum(int(a.size) * a.dtype.itemsize
                       for a in (w0, b0, w1, b1, w2, b2, w3, b3))
    cost = pl.CostEstimate(
        flops=bp * flops_per_row,
        transcendentals=bp * (PAD_OUT + 1),
        bytes_accessed=int(xp.size) * 4 + bp * PAD_OUT * 4 + weight_bytes,
    )

    out_padded = pl.pallas_call(
        mlp_kernel,
        out_shape=jax.ShapeDtypeStruct((bp, PAD_OUT), jnp.float32),
        grid=grid,
        in_specs=in_specs,
        out_specs=pl.BlockSpec((tb, PAD_OUT), row_map),
        compiler_params=pltpu.CompilerParams(
            dimension_semantics=("parallel",)),
        cost_estimate=cost,
    )(xp, w0, b0, w1, b1, w2, b2, w3, b3)

    return out_padded[:B, :f_out]


def init_params(key, f_input=4, f_output=3):
    """Deterministic PyTorch-style (uniform +/- 1/sqrt(fan_in)) init, stored as (in, out)."""
    dims = [(f_input, 128), (128, 64), (64, 32), (32, f_output)]
    params = []
    for (fan_in, fan_out) in dims:
        key, kw, kb = jax.random.split(key, 3)
        bound = 1.0 / jnp.sqrt(fan_in)
        w_t = jax.random.uniform(kw, (fan_in, fan_out), jnp.float32, -bound, bound)
        b = jax.random.uniform(kb, (1, fan_out), jnp.float32, -bound, bound)
        params.append((w_t, b))
    return params


def reference_forward(x, params):
    h = x
    for i, (w, b) in enumerate(params):
        h = h @ w + b
        if i < len(params) - 1:
            h = jnp.maximum(h, 0.0)
    return jax.nn.log_softmax(h, axis=1)


if __name__ == "__main__":
    key = jax.random.PRNGKey(0)
    k_params, k_x = jax.random.split(key)

    B, F_IN, F_OUT = 32, 4, 3
    params = init_params(k_params, F_IN, F_OUT)
    prepared = prepare_params(params)          # hoisted, one-time weight prep
    x = jax.random.normal(k_x, (B, F_IN), dtype=jnp.float32)

    out = mlp_forward(x, prepared)
    out = jax.block_until_ready(out)

    ref = reference_forward(x, params)
    assert out.shape == (B, F_OUT)
    # f32 operands everywhere; tolerance covers XLA/Mosaic default matmul
    # precision differences on TPU (bf16-pass defaults), tighter than the old 5e-2.
    assert jnp.allclose(out, ref, atol=2e-2, rtol=2e-2), "mismatch vs reference"

    print("KERNEL_OK")
</pallas_src>

<mosaic_0001>
module attributes {stable_mosaic.version = 11 : i64} {
  func.func @mlp_kernel(%arg0: i32, %arg1: memref<32x8xf32, #tpu.memory_space<vmem>>, %arg2: memref<8x128xf32, #tpu.memory_space<vmem>>, %arg3: memref<1x128xf32, #tpu.memory_space<vmem>>, %arg4: memref<128x64xf32, #tpu.memory_space<vmem>>, %arg5: memref<1x64xf32, #tpu.memory_space<vmem>>, %arg6: memref<64x32xf32, #tpu.memory_space<vmem>>, %arg7: memref<1x32xf32, #tpu.memory_space<vmem>>, %arg8: memref<32x8xf32, #tpu.memory_space<vmem>>, %arg9: memref<1x8xf32, #tpu.memory_space<vmem>>, %arg10: memref<32x8xf32, #tpu.memory_space<vmem>>) attributes {dimension_semantics = [#tpu.dimension_semantics<parallel>], iteration_bounds = array<i64: 1>, scalar_prefetch = 0 : i64, scratch_operands = 0 : i64, tpu.core_type = #tpu.core_type<tc>, window_params = [{pipeline_mode = #tpu.pipeline_mode<synchronous>, transform_indices = @transform_0, window_bounds = array<i64: 32, 8>}, {pipeline_mode = #tpu.pipeline_mode<synchronous>, transform_indices = @transform_1, window_bounds = array<i64: 8, 128>}, {pipeline_mode = #tpu.pipeline_mode<synchronous>, transform_indices = @transform_2, window_bounds = array<i64: 1, 128>}, {pipeline_mode = #tpu.pipeline_mode<synchronous>, transform_indices = @transform_3, window_bounds = array<i64: 128, 64>}, {pipeline_mode = #tpu.pipeline_mode<synchronous>, transform_indices = @transform_4, window_bounds = array<i64: 1, 64>}, {pipeline_mode = #tpu.pipeline_mode<synchronous>, transform_indices = @transform_5, window_bounds = array<i64: 64, 32>}, {pipeline_mode = #tpu.pipeline_mode<synchronous>, transform_indices = @transform_6, window_bounds = array<i64: 1, 32>}, {pipeline_mode = #tpu.pipeline_mode<synchronous>, transform_indices = @transform_7, window_bounds = array<i64: 32, 8>}, {pipeline_mode = #tpu.pipeline_mode<synchronous>, transform_indices = @transform_8, window_bounds = array<i64: 1, 8>}, {transform_indices = @transform_9, window_bounds = array<i64: 32, 8>}]} {
    %c32_i32 = arith.constant 32 : i32
    %0 = arith.muli %arg0, %c32_i32 : i32
    %1 = tpu.assume_multiple %0, 8 : i32
    %2 = arith.index_cast %1 : i32 to index
    %c0 = arith.constant 0 : index
    %3 = vector.load %arg1[%2, %c0] : memref<32x8xf32, #tpu.memory_space<vmem>>, vector<32x8xf32>
    %c0_0 = arith.constant 0 : index
    %c0_1 = arith.constant 0 : index
    %4 = vector.load %arg2[%c0_0, %c0_1] : memref<8x128xf32, #tpu.memory_space<vmem>>, vector<8x128xf32>
    %cst = arith.constant dense<0.000000e+00> : vector<32x128xf32>
    %5 = tpu.matmul %3, %4, %cst {dimension_numbers = #tpu.dot_dimension_numbers<[1], [0], [0], [1], [0, 0, 1, 1], [], []>} : vector<32x8xf32>, vector<8x128xf32>, vector<32x128xf32> -> vector<32x128xf32>
    %c0_2 = arith.constant 0 : index
    %c0_3 = arith.constant 0 : index
    %6 = vector.load %arg3[%c0_2, %c0_3] : memref<1x128xf32, #tpu.memory_space<vmem>>, vector<1x128xf32>
    %7 = vector.broadcast %6 : vector<1x128xf32> to vector<32x128xf32>
    %8 = arith.addf %5, %7 : vector<32x128xf32>
    %cst_4 = arith.constant 0.000000e+00 : f32
    %9 = vector.broadcast %cst_4 : f32 to vector<32x128xf32>
    %10 = arith.maximumf %8, %9 : vector<32x128xf32>
    %c0_5 = arith.constant 0 : index
    %c0_6 = arith.constant 0 : index
    %11 = vector.load %arg4[%c0_5, %c0_6] : memref<128x64xf32, #tpu.memory_space<vmem>>, vector<128x64xf32>
    %cst_7 = arith.constant dense<0.000000e+00> : vector<32x64xf32>
    %12 = tpu.matmul %10, %11, %cst_7 {dimension_numbers = #tpu.dot_dimension_numbers<[1], [0], [0], [1], [0, 0, 1, 1], [], []>} : vector<32x128xf32>, vector<128x64xf32>, vector<32x64xf32> -> vector<32x64xf32>
    %c0_8 = arith.constant 0 : index
    %c0_9 = arith.constant 0 : index
    %13 = vector.load %arg5[%c0_8, %c0_9] : memref<1x64xf32, #tpu.memory_space<vmem>>, vector<1x64xf32>
    %14 = vector.broadcast %13 : vector<1x64xf32> to vector<32x64xf32>
    %15 = arith.addf %12, %14 : vector<32x64xf32>
    %cst_10 = arith.constant 0.000000e+00 : f32
    %16 = vector.broadcast %cst_10 : f32 to vector<32x64xf32>
    %17 = arith.maximumf %15, %16 : vector<32x64xf32>
    %c0_11 = arith.constant 0 : index
    %c0_12 = arith.constant 0 : index
    %18 = vector.load %arg6[%c0_11, %c0_12] : memref<64x32xf32, #tpu.memory_space<vmem>>, vector<64x32xf32>
    %cst_13 = arith.constant dense<0.000000e+00> : vector<32x32xf32>
    %19 = tpu.matmul %17, %18, %cst_13 {dimension_numbers = #tpu.dot_dimension_numbers<[1], [0], [0], [1], [0, 0, 1, 1], [], []>} : vector<32x64xf32>, vector<64x32xf32>, vector<32x32xf32> -> vector<32x32xf32>
    %c0_14 = arith.constant 0 : index
    %c0_15 = arith.constant 0 : index
    %20 = vector.load %arg7[%c0_14, %c0_15] : memref<1x32xf32, #tpu.memory_space<vmem>>, vector<1x32xf32>
    %21 = vector.broadcast %20 : vector<1x32xf32> to vector<32x32xf32>
    %22 = arith.addf %19, %21 : vector<32x32xf32>
    %cst_16 = arith.constant 0.000000e+00 : f32
    %23 = vector.broadcast %cst_16 : f32 to vector<32x32xf32>
    %24 = arith.maximumf %22, %23 : vector<32x32xf32>
    %c0_17 = arith.constant 0 : index
    %c0_18 = arith.constant 0 : index
    %25 = vector.load %arg8[%c0_17, %c0_18] : memref<32x8xf32, #tpu.memory_space<vmem>>, vector<32x8xf32>
    %cst_19 = arith.constant dense<0.000000e+00> : vector<32x8xf32>
    %26 = tpu.matmul %24, %25, %cst_19 {dimension_numbers = #tpu.dot_dimension_numbers<[1], [0], [0], [1], [0, 0, 1, 1], [], []>} : vector<32x32xf32>, vector<32x8xf32>, vector<32x8xf32> -> vector<32x8xf32>
    %c0_20 = arith.constant 0 : index
    %c0_21 = arith.constant 0 : index
    %27 = vector.load %arg9[%c0_20, %c0_21] : memref<1x8xf32, #tpu.memory_space<vmem>>, vector<1x8xf32>
    %28 = vector.broadcast %27 : vector<1x8xf32> to vector<32x8xf32>
    %29 = arith.addf %26, %28 : vector<32x8xf32>
    %cst_22 = arith.constant dense<0xFF800000> : vector<32xf32>
    %30 = vector.multi_reduction <maximumf>, %29, %cst_22 [1] : vector<32x8xf32> to vector<32xf32>
    %31 = vector.shape_cast %30 : vector<32xf32> to vector<32x1xf32>
    %32 = vector.broadcast %31 : vector<32x1xf32> to vector<32x8xf32>
    %33 = arith.subf %29, %32 : vector<32x8xf32>
    %34 = math.exp %33 : vector<32x8xf32>
    %cst_23 = arith.constant dense<0.000000e+00> : vector<32xf32>
    %35 = vector.multi_reduction <add>, %34, %cst_23 [1] : vector<32x8xf32> to vector<32xf32>
    %36 = vector.shape_cast %35 : vector<32xf32> to vector<32x1xf32>
    %37 = vector.broadcast %31 : vector<32x1xf32> to vector<32x8xf32>
    %38 = arith.subf %29, %37 : vector<32x8xf32>
    %39 = math.log %36 : vector<32x1xf32>
    %40 = vector.broadcast %39 : vector<32x1xf32> to vector<32x8xf32>
    %41 = arith.subf %38, %40 : vector<32x8xf32>
    %c0_24 = arith.constant 0 : index
    %c0_25 = arith.constant 0 : index
    %42 = vector.load %arg10[%c0_24, %c0_25] : memref<32x8xf32, #tpu.memory_space<vmem>>, vector<32x8xf32>
    tpu.vector_store %arg10[%c0_24, %c0_25], %41 {strides = array<i32>} : memref<32x8xf32, #tpu.memory_space<vmem>>, vector<32x8xf32>,
    return
  }
  func.func @transform_0(%arg0: i32) -> (i32, i32) {
    %c0_i32 = arith.constant 0 : i32
    %c0_i32_0 = arith.constant 0 : i32
    %c0_i32_1 = arith.constant 0 : i32
    return %c0_i32, %c0_i32_0 : i32, i32
  }
  func.func @transform_1(%arg0: i32) -> (i32, i32) {
    %c0_i32 = arith.constant 0 : i32
    %c0_i32_0 = arith.constant 0 : i32
    %c0_i32_1 = arith.constant 0 : i32
    return %c0_i32, %c0_i32_0 : i32, i32
  }
  func.func @transform_2(%arg0: i32) -> (i32, i32) {
    %c0_i32 = arith.constant 0 : i32
    %c0_i32_0 = arith.constant 0 : i32
    %c0_i32_1 = arith.constant 0 : i32
    return %c0_i32, %c0_i32_0 : i32, i32
  }
  func.func @transform_3(%arg0: i32) -> (i32, i32) {
    %c0_i32 = arith.constant 0 : i32
    %c0_i32_0 = arith.constant 0 : i32
    %c0_i32_1 = arith.constant 0 : i32
    return %c0_i32, %c0_i32_0 : i32, i32
  }
  func.func @transform_4(%arg0: i32) -> (i32, i32) {
    %c0_i32 = arith.constant 0 : i32
    %c0_i32_0 = arith.constant 0 : i32
    %c0_i32_1 = arith.constant 0 : i32
    return %c0_i32, %c0_i32_0 : i32, i32
  }
  func.func @transform_5(%arg0: i32) -> (i32, i32) {
    %c0_i32 = arith.constant 0 : i32
    %c0_i32_0 = arith.constant 0 : i32
    %c0_i32_1 = arith.constant 0 : i32
    return %c0_i32, %c0_i32_0 : i32, i32
  }
  func.func @transform_6(%arg0: i32) -> (i32, i32) {
    %c0_i32 = arith.constant 0 : i32
    %c0_i32_0 = arith.constant 0 : i32
    %c0_i32_1 = arith.constant 0 : i32
    return %c0_i32, %c0_i32_0 : i32, i32
  }
  func.func @transform_7(%arg0: i32) -> (i32, i32) {
    %c0_i32 = arith.constant 0 : i32
    %c0_i32_0 = arith.constant 0 : i32
    %c0_i32_1 = arith.constant 0 : i32
    return %c0_i32, %c0_i32_0 : i32, i32
  }
  func.func @transform_8(%arg0: i32) -> (i32, i32) {
    %c0_i32 = arith.constant 0 : i32
    %c0_i32_0 = arith.constant 0 : i32
    %c0_i32_1 = arith.constant 0 : i32
    return %c0_i32, %c0_i32_0 : i32, i32
  }
  func.func @transform_9(%arg0: i32) -> (i32, i32) {
    %c0_i32 = arith.constant 0 : i32
    %c0_i32_0 = arith.constant 0 : i32
    return %arg0, %c0_i32 : i32, i32
  }
}

</mosaic_0001>

<llo_original>
// kernel: tpu_custom_call.1
$region0: #{tpu_custom_call.1}
  #allocation0 [shape = 'u32[]', space=smem, size = 0x4, offset = 0x4, fixed_abs, tag = 'smem constant byte address 0x4 - core index']
  #allocation1 [shape = 'u32[72,128]{1,0:T(1,128)}', space=vmem, size = 0x9000, scoped, tag = 'internal scratch']
  %s0 = inlined_call_operand.vmem [shape: f32[32,8], index: 0, kind: input, shape index: {}]
  %s1 = inlined_call_operand.vmem [shape: f32[8,128], index: 1, kind: input, shape index: {}]
  %s2 = inlined_call_operand.vmem [shape: f32[1,128], index: 2, kind: input, shape index: {}]
  %s3 = inlined_call_operand.vmem [shape: f32[128,64], index: 3, kind: input, shape index: {}]
  %s4 = inlined_call_operand.vmem [shape: f32[1,64], index: 4, kind: input, shape index: {}]
  %s5 = inlined_call_operand.vmem [shape: f32[64,32], index: 5, kind: input, shape index: {}]
  %s6 = inlined_call_operand.vmem [shape: f32[1,32], index: 6, kind: input, shape index: {}]
  %s7 = inlined_call_operand.vmem [shape: f32[32,8], index: 7, kind: input, shape index: {}]
  %s8 = inlined_call_operand.vmem [shape: f32[1,8], index: 8, kind: input, shape index: {}]
  %s9 = inlined_call_operand.vmem [shape: f32[32,8], index: 9, kind: output, shape index: {}]
  %s10 = sld [smem:[#allocation0]]
  $region46: #{tpu_custom_call.1} parent=0
    _
  %s12 = ssub.s32 1, %s10
  %s13 = scalar_select 0, %s12, %s10
  // Predicated region
  $region2: #{tpu_custom_call.1} parent=0 // pred_check
    _
  $region3: #{tpu_custom_call.1} parent=0 // pred_check_branch
    %15 = sbr.rel (0) target = $region5
  $region4: #{tpu_custom_call.1} parent=0 // pred_region
    _
  $region5: #{tpu_custom_call.1} parent=0 // pred_fallthru
    _
  // Predicated region
  $region6: #{tpu_custom_call.1} parent=0 // pred_check
    _
  $region7: #{tpu_custom_call.1} parent=0 // pred_check_branch
    %17 = sbr.rel (0) target = $region9
  $region8: #{tpu_custom_call.1} parent=0 // pred_region
    _
  $region9: #{tpu_custom_call.1} parent=0 // pred_fallthru
    _
  // Predicated region
  $region10: #{tpu_custom_call.1} parent=0 // pred_check
    _
  $region11: #{tpu_custom_call.1} parent=0 // pred_check_branch
    %19 = sbr.rel (0) target = $region13
  $region12: #{tpu_custom_call.1} parent=0 // pred_region
    _
  $region13: #{tpu_custom_call.1} parent=0 // pred_fallthru
    _
  // Predicated region
  $region14: #{tpu_custom_call.1} parent=0 // pred_check
    _
  $region15: #{tpu_custom_call.1} parent=0 // pred_check_branch
    %21 = sbr.rel (0) target = $region17
  $region16: #{tpu_custom_call.1} parent=0 // pred_region
    _
  $region17: #{tpu_custom_call.1} parent=0 // pred_fallthru
    _
  // Predicated region
  $region18: #{tpu_custom_call.1} parent=0 // pred_check
    _
  $region19: #{tpu_custom_call.1} parent=0 // pred_check_branch
    %23 = sbr.rel (0) target = $region21
  $region20: #{tpu_custom_call.1} parent=0 // pred_region
    _
  $region21: #{tpu_custom_call.1} parent=0 // pred_fallthru
    _
  // Predicated region
  $region22: #{tpu_custom_call.1} parent=0 // pred_check
    _
  $region23: #{tpu_custom_call.1} parent=0 // pred_check_branch
    %25 = sbr.rel (0) target = $region25
  $region24: #{tpu_custom_call.1} parent=0 // pred_region
    _
  $region25: #{tpu_custom_call.1} parent=0 // pred_fallthru
    _
  // Predicated region
  $region26: #{tpu_custom_call.1} parent=0 // pred_check
    _
  $region27: #{tpu_custom_call.1} parent=0 // pred_check_branch
    %27 = sbr.rel (0) target = $region29
  $region28: #{tpu_custom_call.1} parent=0 // pred_region
    _
  $region29: #{tpu_custom_call.1} parent=0 // pred_fallthru
    _
  // Predicated region
  $region30: #{tpu_custom_call.1} parent=0 // pred_check
    _
  $region31: #{tpu_custom_call.1} parent=0 // pred_check_branch
    %29 = sbr.rel (0) target = $region33
  $region32: #{tpu_custom_call.1} parent=0 // pred_region
    _
  $region33: #{tpu_custom_call.1} parent=0 // pred_fallthru
    _
  // Predicated region
  $region34: #{tpu_custom_call.1} parent=0 // pred_check
    _
  $region35: #{tpu_custom_call.1} parent=0 // pred_check_branch
    %31 = sbr.rel (0) target = $region37
  $region36: #{tpu_custom_call.1} parent=0 // pred_region
    _
  $region37: #{tpu_custom_call.1} parent=0 // pred_fallthru
    _
  %s32 = smul.u32 0, 32
  %s33 = scalar_lea.vmem %s0, %s32
  %v34 = vld [vmem:[%s33] sm:$0xff]
  %v35 = vld [vmem:[%s33 + $0x8] sm:$0xff]
  %v36 = vld [vmem:[%s33 + $0x10] sm:$0xff]
  %v37 = vld [vmem:[%s33 + $0x18] sm:$0xff]
  %v38 = vld [vmem:[%s1] sm:$0xff]
  %v39 = vld [vmem:[%s2] sm:$0x1]
  %v41 = vperm.slane %v39, 0
  %vm43 = vcmask 64512
  %v45 = vsel %vm43, %v34, 0
  %v48 = vsel %vm43, %v35, 0
  %v51 = vsel %vm43, %v36, 0
  %v54 = vsel %vm43, %v37, 0
  %56 = vmatpush.msra.mxu0 0.0
  %57 = vmatpush.msra.mxu0 0.0
  %58 = vmatpush.msra.mxu0 0.0
  %59 = vmatpush.msra.mxu0 0.0
  %60 = vmatpush.msra.mxu0 0.0
  %61 = vmatpush.msra.mxu0 0.0
  %62 = vmatpush.msra.mxu0 0.0
  %63 = vmatpush.msra.mxu0 0.0
  %64 = vmatpush.msra.mxu0 0.0
  %65 = vmatpush.msra.mxu0 0.0
  %66 = vmatpush.msra.mxu0 0.0
  %67 = vmatpush.msra.mxu0 0.0
  %68 = vmatpush.msra.mxu0 0.0
  %69 = vmatpush.msra.mxu0 0.0
  %70 = vmatpush.msra.mxu0 0.0
  %71 = vmatpush.msra.mxu0 %v38
  %72 = vmatmul.f32.gmra.mxu0 %v45
  %v73 = vpop.f32.mrf.mxu0
  %v74 = vadd.f32 %v41, %v73
  %75 = vmatmul.f32.gmra.mxu0 %v48
  %v76 = vpop.f32.mrf.mxu0
  %v77 = vadd.f32 %v41, %v76
  %78 = vmatmul.f32.gmra.mxu0 %v51
  %v79 = vpop.f32.mrf.mxu0
  %v80 = vadd.f32 %v41, %v79
  %81 = vmatmul.f32.gmra.mxu0 %v54
  %v82 = vpop.f32.mrf.mxu0
  %v83 = vadd.f32 %v41, %v82
  %84 = vdwg.mxu0
  %v85 = vmax.f32 %v74, 0.0
  %v86 = vmax.f32 %v77, 0.0
  %v87 = vmax.f32 %v80, 0.0
  %v88 = vmax.f32 %v83, 0.0
  %v89 = vld [vmem:[%s3] sm:$0xff]
  %v90 = vld [vmem:[%s3 + $0x8] sm:$0xff]
  %v91 = vld [vmem:[%s3 + $0x10] sm:$0xff]
  %v92 = vld [vmem:[%s3 + $0x18] sm:$0xff]
  %v93 = vld [vmem:[%s3 + $0x20] sm:$0xff]
  %v94 = vld [vmem:[%s3 + $0x28] sm:$0xff]
  %v95 = vld [vmem:[%s3 + $0x30] sm:$0xff]
  %v96 = vld [vmem:[%s3 + $0x38] sm:$0xff]
  %v97 = vld [vmem:[%s3 + $0x40] sm:$0xff]
  %v98 = vld [vmem:[%s3 + $0x48] sm:$0xff]
  %v99 = vld [vmem:[%s3 + $0x50] sm:$0xff]
  %v100 = vld [vmem:[%s3 + $0x58] sm:$0xff]
  %v101 = vld [vmem:[%s3 + $0x60] sm:$0xff]
  %v102 = vld [vmem:[%s3 + $0x68] sm:$0xff]
  %v103 = vld [vmem:[%s3 + $0x70] sm:$0xff]
  %v104 = vld [vmem:[%s3 + $0x78] sm:$0xff]
  %v105 = vld [vmem:[%s4] sm:$0x1]
  %v107 = vperm.slane %v105, 0
  %109 = vmatpush.msra.mxu0 %v104
  %110 = vmatpush.msra.mxu0 %v103
  %111 = vmatpush.msra.mxu0 %v102
  %112 = vmatpush.msra.mxu0 %v101
  %113 = vmatpush.msra.mxu0 %v100
  %114 = vmatpush.msra.mxu0 %v99
  %115 = vmatpush.msra.mxu0 %v98
  %116 = vmatpush.msra.mxu0 %v97
  %117 = vmatpush.msra.mxu0 %v96
  %118 = vmatpush.msra.mxu0 %v95
  %119 = vmatpush.msra.mxu0 %v94
  %120 = vmatpush.msra.mxu0 %v93
  %121 = vmatpush.msra.mxu0 %v92
  %122 = vmatpush.msra.mxu0 %v91
  %123 = vmatpush.msra.mxu0 %v90
  %124 = vmatpush.msra.mxu0 %v89
  %125 = vmatmul.f32.gmra.mxu0 %v85
  %v126 = vpop.f32.mrf.mxu0
  %v127 = vadd.f32 %v107, %v126
  %128 = vmatmul.f32.gmra.mxu0 %v86
  %v129 = vpop.f32.mrf.mxu0
  %v130 = vadd.f32 %v107, %v129
  %131 = vmatmul.f32.gmra.mxu0 %v87
  %v132 = vpop.f32.mrf.mxu0
  %v133 = vadd.f32 %v107, %v132
  %134 = vmatmul.f32.gmra.mxu0 %v88
  %v135 = vpop.f32.mrf.mxu0
  %v136 = vadd.f32 %v107, %v135
  %137 = vdwg.mxu0
  %v138 = vmax.f32 %v127, 0.0
  %v139 = vmax.f32 %v130, 0.0
  %v140 = vmax.f32 %v133, 0.0
  %v141 = vmax.f32 %v136, 0.0
  %v142 = vld [vmem:[%s5] sm:$0xff]
  %v143 = vld [vmem:[%s5 + $0x8] sm:$0xff]
  %v144 = vld [vmem:[%s5 + $0x10] sm:$0xff]
  %v145 = vld [vmem:[%s5 + $0x18] sm:$0xff]
  %v146 = vld [vmem:[%s5 + $0x20] sm:$0xff]
  %v147 = vld [vmem:[%s5 + $0x28] sm:$0xff]
  %v148 = vld [vmem:[%s5 + $0x30] sm:$0xff]
  %v149 = vld [vmem:[%s5 + $0x38] sm:$0xff]
  %v150 = vld [vmem:[%s6] sm:$0x1]
  %v152 = vperm.slane %v150, 0
  %vm154 = vcmask 523264
  %v156 = vsel %vm154, %v138, 0
  %v159 = vsel %vm154, %v139, 0
  %v162 = vsel %vm154, %v140, 0
  %v165 = vsel %vm154, %v141, 0
  %167 = vmatpush.msra.mxu0 0.0
  %168 = vmatpush.msra.mxu0 0.0
  %169 = vmatpush.msra.mxu0 0.0
  %170 = vmatpush.msra.mxu0 0.0
  %171 = vmatpush.msra.mxu0 0.0
  %172 = vmatpush.msra.mxu0 0.0
  %173 = vmatpush.msra.mxu0 0.0
  %174 = vmatpush.msra.mxu0 0.0
  %175 = vmatpush.msra.mxu0 %v149
  %176 = vmatpush.msra.mxu0 %v148
  %177 = vmatpush.msra.mxu0 %v147
  %178 = vmatpush.msra.mxu0 %v146
  %179 = vmatpush.msra.mxu0 %v145
  %180 = vmatpush.msra.mxu0 %v144
  %181 = vmatpush.msra.mxu0 %v143
  %182 = vmatpush.msra.mxu0 %v142
  %183 = vmatmul.f32.gmra.mxu0 %v156
  %v184 = vpop.f32.mrf.mxu0
  %v185 = vadd.f32 %v152, %v184
  %186 = vmatmul.f32.gmra.mxu0 %v159
  %v187 = vpop.f32.mrf.mxu0
  %v188 = vadd.f32 %v152, %v187
  %189 = vmatmul.f32.gmra.mxu0 %v162
  %v190 = vpop.f32.mrf.mxu0
  %v191 = vadd.f32 %v152, %v190
  %192 = vmatmul.f32.gmra.mxu0 %v165
  %v193 = vpop.f32.mrf.mxu0
  %v194 = vadd.f32 %v152, %v193
  %195 = vdwg.mxu0
  %v196 = vmax.f32 %v185, 0.0
  %v197 = vmax.f32 %v188, 0.0
  %v198 = vmax.f32 %v191, 0.0
  %v199 = vmax.f32 %v194, 0.0
  %v200 = vld [vmem:[%s7] sm:$0xff]
  %v201 = vld [vmem:[%s7 + $0x8] sm:$0xff]
  %v202 = vld [vmem:[%s7 + $0x10] sm:$0xff]
  %v203 = vld [vmem:[%s7 + $0x18] sm:$0xff]
  %v204 = vld [vmem:[%s8] sm:$0x1]
  %v206 = vperm.slane %v204, 0
  %vm208 = vcmask 261120
  %v210 = vsel %vm208, %v196, 0
  %v213 = vsel %vm208, %v197, 0
  %v216 = vsel %vm208, %v198, 0
  %v219 = vsel %vm208, %v199, 0
  %221 = vmatpush.msra.mxu0 0.0
  %222 = vmatpush.msra.mxu0 0.0
  %223 = vmatpush.msra.mxu0 0.0
  %224 = vmatpush.msra.mxu0 0.0
  %225 = vmatpush.msra.mxu0 0.0
  %226 = vmatpush.msra.mxu0 0.0
  %227 = vmatpush.msra.mxu0 0.0
  %228 = vmatpush.msra.mxu0 0.0
  %229 = vmatpush.msra.mxu0 0.0
  %230 = vmatpush.msra.mxu0 0.0
  %231 = vmatpush.msra.mxu0 0.0
  %232 = vmatpush.msra.mxu0 0.0
  %233 = vmatpush.msra.mxu0 %v203
  %234 = vmatpush.msra.mxu0 %v202
  %235 = vmatpush.msra.mxu0 %v201
  %236 = vmatpush.msra.mxu0 %v200
  %237 = vmatmul.f32.gmra.mxu0 %v210
  %v238 = vpop.f32.mrf.mxu0
  %v239 = vadd.f32 %v206, %v238
  %240 = vmatmul.f32.gmra.mxu0 %v213
  %v241 = vpop.f32.mrf.mxu0
  %v242 = vadd.f32 %v206, %v241
  %243 = vmatmul.f32.gmra.mxu0 %v216
  %v244 = vpop.f32.mrf.mxu0
  %v245 = vadd.f32 %v206, %v244
  %246 = vmatmul.f32.gmra.mxu0 %v219
  %v247 = vpop.f32.mrf.mxu0
  %v248 = vadd.f32 %v206, %v247
  %249 = vdwg.mxu0
  %v250 = vsel %vm43, %v239, -inf
  %251 = vmax.xlane.f32.xlu0 %v250
  %v252 = vpop.xlane.xlu0 %251
  %v253 = vsel %vm43, %v242, -inf
  %254 = vmax.xlane.f32.xlu0 %v253
  %v255 = vpop.xlane.xlu0 %254
  %v256 = vsel %vm43, %v245, -inf
  %257 = vmax.xlane.f32.xlu0 %v256
  %v258 = vpop.xlane.xlu0 %257
  %v259 = vsel %vm43, %v248, -inf
  %260 = vmax.xlane.f32.xlu0 %v259
  %v261 = vpop.xlane.xlu0 %260
  %v262 = vsub.f32 %v239, %v252
  %v263 = vsub.f32 %v242, %v255
  %v264 = vsub.f32 %v245, %v258
  %v265 = vsub.f32 %v248, %v261
  %v266 = vmul.f32 %v262, 1.442695
  %v267 = vpow.pop %v266
  %v268 = vmul.f32 %v263, 1.442695
  %v269 = vpow.pop %v268
  %v270 = vmul.f32 %v264, 1.442695
  %v271 = vpow.pop %v270
  %v272 = vmul.f32 %v265, 1.442695
  %v273 = vpow.pop %v272
  %v274 = vsel %vm43, %v267, 0.0
  %275 = vadd.xlane.f32.xlu0 %v274
  %v276 = vpop.xlane.xlu0 %275
  %v277 = vsel %vm43, %v269, 0.0
  %278 = vadd.xlane.f32.xlu0 %v277
  %v279 = vpop.xlane.xlu0 %278
  %v280 = vsel %vm43, %v271, 0.0
  %281 = vadd.xlane.f32.xlu0 %v280
  %v282 = vpop.xlane.xlu0 %281
  %v283 = vsel %vm43, %v273, 0.0
  %284 = vadd.xlane.f32.xlu0 %v283
  %v285 = vpop.xlane.xlu0 %284
  %v286 = vlog2.pop %v276
  %v287 = vmul.f32 %v286, 0.6931472
  %v288 = vlog2.pop %v279
  %v289 = vmul.f32 %v288, 0.6931472
  %v290 = vlog2.pop %v282
  %v291 = vmul.f32 %v290, 0.6931472
  %v292 = vlog2.pop %v285
  %v293 = vmul.f32 %v292, 0.6931472
  %v294 = vsub.f32 %v262, %v287
  %v295 = vsub.f32 %v263, %v289
  %v296 = vsub.f32 %v264, %v291
  %v297 = vsub.f32 %v265, %v293
  %298 = vst.msk [vmem:[%s9] sm:$0xff] %vm43, %v294
  %299 = vst.msk [vmem:[%s9 + $0x8] sm:$0xff] %vm43, %v295
  %300 = vst.msk [vmem:[%s9 + $0x10] sm:$0xff] %vm43, %v296
  %301 = vst.msk [vmem:[%s9 + $0x18] sm:$0xff] %vm43, %v297
  // Predicated region
  $region38: #{tpu_custom_call.1} parent=0 // pred_check
    _
  $region39: #{tpu_custom_call.1} parent=0 // pred_check_branch
    %303 = sbr.rel (0) target = $region41
  $region40: #{tpu_custom_call.1} parent=0 // pred_region
    _
  $region41: #{tpu_custom_call.1} parent=0 // pred_fallthru
    _
  // Predicated region
  $region42: #{tpu_custom_call.1} parent=0 // pred_check
    _
  $region43: #{tpu_custom_call.1} parent=0 // pred_check_branch
    %305 = sbr.rel (0) target = $region45
  $region44: #{tpu_custom_call.1} parent=0 // pred_region
    _
  $region45: #{tpu_custom_call.1} parent=0 // pred_fallthru
    _

</llo_original>
